<compile_context>
chip_gen: v6e
topology: v6e:2x2x1
jax: 0.10.0
libtpu: 0.0.40
codegen_flags: <defaults>
</compile_context>

<pallas_src>
import math
from typing import NamedTuple

import jax
import jax.numpy as jnp
from jax.experimental import pallas as pl
from jax.experimental.pallas import tpu as pltpu


def _round_up(x, m):
    return (x + m - 1) // m * m


# ---------------------------------------------------------------------------
# Kernels
# ---------------------------------------------------------------------------

def _linear_relu_kernel(x_ref, w_ref, b_ref, o_ref):
    """Single-K-step fused Linear + ReLU: no accumulator scratch, no pl.when."""
    y = jnp.dot(x_ref[...], w_ref[...], preferred_element_type=jnp.float32)
    y = y + b_ref[...]                       # bias kept in f32
    o_ref[...] = jnp.maximum(y, 0.0).astype(o_ref.dtype)


def _linear_relu_kernel_ksplit(x_ref, w_ref, b_ref, o_ref, acc_ref):
    """K-split variant: f32 VMEM accumulator + pl.when init / finalize."""
    k = pl.program_id(2)

    @pl.when(k == 0)
    def _():
        acc_ref[...] = jnp.zeros_like(acc_ref)

    acc_ref[...] += jnp.dot(x_ref[...], w_ref[...],
                            preferred_element_type=jnp.float32)

    @pl.when(k == pl.num_programs(2) - 1)
    def _():
        y = acc_ref[...] + b_ref[...]
        o_ref[...] = jnp.maximum(y, 0.0).astype(o_ref.dtype)


# ---------------------------------------------------------------------------
# One-time parameter preparation (hoisted out of the hot path)
# ---------------------------------------------------------------------------

def _vmem_physical_bytes():
    try:
        info = pltpu.get_tpu_info()
        cap = getattr(info, "vmem_capacity_bytes", None)
        if cap:
            return int(cap)
    except Exception:
        pass
    return 64 << 20   # v7x has the smallest per-TC VMEM; safe on all generations.


class PreparedUnit(NamedTuple):
    w_padded: jax.Array     # (Cinp, Coutp) — pre-transposed + zero-padded weight
    b_padded: jax.Array     # (1, Coutp)    — f32 zero-padded bias
    cin: int
    cout: int
    tn: int
    tk: int
    tm_cap: int
    vmem_limit_bytes: int


def prepare_unit_params(weight, bias, *, batch_hint=128, compute_dtype=None,
                        tm_max=512, tn_max=512):
    """Transpose/pad the nn.Linear weight ONCE and pick generation-aware tiles.

    weight: (Cout, Cin) PyTorch layout; bias: (Cout,).
    """
    Cout, Cin = weight.shape
    compute_dtype = jnp.dtype(compute_dtype or weight.dtype)
    in_itemsize = compute_dtype.itemsize
    out_itemsize = 4

    phys = _vmem_physical_bytes()
    budget = int(phys * 0.60)          # cap on the double-buffered working set
    vmem_limit = int(phys * 0.75)      # scoped-VMEM limit handed to Mosaic

    sub = 16 if in_itemsize == 2 else 8    # bf16 packs 16 sublanes per vreg

    tn = min(_round_up(Cout, 128), tn_max)
    tk = _round_up(Cin, 128)               # try full K first -> no accumulator
    tm_budget = tm_max

    # Megacore (v7x = 2 TCs): if B gives only one M block, make sure the N axis
    # has >= 2 blocks so the second TensorCore has work.
    if _round_up(max(batch_hint, 1), sub) <= tm_budget and Cout > 128:
        tn = min(tn, _round_up((Cout + 1) // 2, 128))

    full_k = tk

    def working_set(tm_, tn_, tk_, k_split):
        ws = 2 * (tm_ * tk_ * in_itemsize          # x tile (double buffered)
                  + tk_ * tn_ * in_itemsize        # w tile
                  + tn_ * 4                        # bias tile
                  + tm_ * tn_ * out_itemsize)      # out tile
        if k_split:
            ws += tm_ * tn_ * 4                    # f32 accumulator scratch
        return ws

    # Shrink K, then N, then M until the working set fits the budget.
    while working_set(tm_budget, tn, tk, tk < full_k) > budget and tk > 128:
        tk = max(128, _round_up(tk // 2, 128))
    while working_set(tm_budget, tn, tk, tk < full_k) > budget and tn > 128:
        tn = max(128, _round_up(tn // 2, 128))
    while working_set(tm_budget, tn, tk, tk < full_k) > budget and tm_budget > sub:
        tm_budget = max(sub, _round_up(tm_budget // 2, sub))

    Cinp = _round_up(Cin, tk)
    Coutp = _round_up(Cout, tn)

    # Pre-transpose to (Cin, Cout) and zero-pad ONCE, outside the hot path.
    w_padded = jnp.pad(weight.T, ((0, Cinp - Cin), (0, Coutp - Cout)))
    w_padded = w_padded.astype(compute_dtype)
    b_padded = jnp.pad(bias.astype(jnp.float32), (0, Coutp - Cout)).reshape(1, Coutp)

    return PreparedUnit(w_padded, b_padded, Cin, Cout, tn, tk, tm_budget, vmem_limit)


# ---------------------------------------------------------------------------
# Forward pass (hot path)
# ---------------------------------------------------------------------------

def unit_forward(x, prepared: PreparedUnit):
    """ReLU(x @ W^T + b) with the pre-prepared (transposed + padded) params.

    x: (B, Cin) -> (B, Cout), in x.dtype.
    """
    B, Cin = x.shape
    assert Cin == prepared.cin, (Cin, prepared.cin)

    w, b = prepared.w_padded, prepared.b_padded
    Cinp, Coutp = w.shape
    tn, tk, tm_cap = prepared.tn, prepared.tk, prepared.tm_cap

    sub = 16 if jnp.dtype(w.dtype).itemsize == 2 else 8
    tm = min(_round_up(B, sub), tm_cap)
    Bp = _round_up(B, tm)

    xp = jnp.pad(x, ((0, Bp - B), (0, Cinp - Cin))).astype(w.dtype)

    m_blocks = Bp // tm
    n_blocks = Coutp // tn
    k_blocks = Cinp // tk

    cost = pl.CostEstimate(
        flops=2 * Bp * Cinp * Coutp,
        transcendentals=0,
        bytes_accessed=int(xp.size * xp.dtype.itemsize * n_blocks
                           + w.size * jnp.dtype(w.dtype).itemsize * m_blocks
                           + b.size * 4
                           + Bp * Coutp * jnp.dtype(x.dtype).itemsize),
    )

    if k_blocks == 1:
        # Common case: whole contraction in one tile -> no accumulator scratch.
        out_padded = pl.pallas_call(
            _linear_relu_kernel,
            out_shape=jax.ShapeDtypeStruct((Bp, Coutp), x.dtype),
            grid_spec=pltpu.PrefetchScalarGridSpec(
                num_scalar_prefetch=0,
                grid=(m_blocks, n_blocks),
                in_specs=[
                    pl.BlockSpec((tm, tk), lambda i, j: (i, 0)),   # x tile
                    pl.BlockSpec((tk, tn), lambda i, j: (0, j)),   # w tile (Cin,Cout)
                    pl.BlockSpec((1, tn), lambda i, j: (0, j)),    # bias tile
                ],
                out_specs=pl.BlockSpec((tm, tn), lambda i, j: (i, j)),
            ),
            compiler_params=pltpu.CompilerParams(
                dimension_semantics=("parallel", "parallel"),
                vmem_limit_bytes=prepared.vmem_limit_bytes,
            ),
            cost_estimate=cost,
        )(xp, w, b)
    else:
        out_padded = pl.pallas_call(
            _linear_relu_kernel_ksplit,
            out_shape=jax.ShapeDtypeStruct((Bp, Coutp), x.dtype),
            grid_spec=pltpu.PrefetchScalarGridSpec(
                num_scalar_prefetch=0,
                grid=(m_blocks, n_blocks, k_blocks),
                in_specs=[
                    pl.BlockSpec((tm, tk), lambda i, j, k: (i, k)),   # x tile
                    pl.BlockSpec((tk, tn), lambda i, j, k: (k, j)),   # w tile
                    pl.BlockSpec((1, tn), lambda i, j, k: (0, j)),    # bias tile
                ],
                out_specs=pl.BlockSpec((tm, tn), lambda i, j, k: (i, j)),
                scratch_shapes=[pltpu.VMEM((tm, tn), jnp.float32)],
            ),
            compiler_params=pltpu.CompilerParams(
                dimension_semantics=("parallel", "parallel", "arbitrary"),
                vmem_limit_bytes=prepared.vmem_limit_bytes,
            ),
            cost_estimate=cost,
        )(xp, w, b)

    return out_padded[:B, :prepared.cout]


def init_unit_params(key, in_channels, out_channels, dtype=jnp.float32):
    """Deterministic init matching nn.Linear's default (kaiming-uniform style)."""
    kw, kb = jax.random.split(key)
    bound = 1.0 / math.sqrt(in_channels)
    weight = jax.random.uniform(
        kw, (out_channels, in_channels), dtype, minval=-bound, maxval=bound)
    bias = jax.random.uniform(
        kb, (out_channels,), dtype, minval=-bound, maxval=bound)
    return weight, bias


if __name__ == "__main__":
    key = jax.random.PRNGKey(0)
    k_x, k_p = jax.random.split(key)

    batch = 8
    in_channels = 16
    out_channels = 32

    x = jax.random.normal(k_x, (batch, in_channels), dtype=jnp.float32)
    weight, bias = init_unit_params(k_p, in_channels, out_channels)

    # One-time preparation (hoisted transpose / pad / tile selection).
    prepared = prepare_unit_params(weight, bias, batch_hint=batch)

    out = unit_forward(x, prepared)
    out = jax.block_until_ready(out)

    # Reference check against plain JAX (f32 compute path -> tight tolerances).
    ref = jnp.maximum(x @ weight.T + bias, 0.0)
    assert out.shape == (batch, out_channels)
    assert jnp.allclose(out, ref, atol=1e-5, rtol=1e-5)

    print("KERNEL_OK")
</pallas_src>

<mosaic_0001>
module attributes {stable_mosaic.version = 11 : i64} {
  func.func @_linear_relu_kernel(%arg0: i32, %arg1: i32, %arg2: memref<8x128xf32, #tpu.memory_space<vmem>>, %arg3: memref<128x128xf32, #tpu.memory_space<vmem>>, %arg4: memref<1x128xf32, #tpu.memory_space<vmem>>, %arg5: memref<8x128xf32, #tpu.memory_space<vmem>>) attributes {dimension_semantics = [#tpu.dimension_semantics<parallel>, #tpu.dimension_semantics<parallel>], iteration_bounds = array<i64: 1, 1>, scalar_prefetch = 0 : i64, scratch_operands = 0 : i64, tpu.core_type = #tpu.core_type<tc>, window_params = [{transform_indices = @transform_0, window_bounds = array<i64: 8, 128>}, {transform_indices = @transform_1, window_bounds = array<i64: 128, 128>}, {transform_indices = @transform_2, window_bounds = array<i64: 1, 128>}, {transform_indices = @transform_3, window_bounds = array<i64: 8, 128>}]} {
    %c0 = arith.constant 0 : index
    %c0_0 = arith.constant 0 : index
    %0 = vector.load %arg2[%c0, %c0_0] : memref<8x128xf32, #tpu.memory_space<vmem>>, vector<8x128xf32>
    %c0_1 = arith.constant 0 : index
    %c0_2 = arith.constant 0 : index
    %1 = vector.load %arg3[%c0_1, %c0_2] : memref<128x128xf32, #tpu.memory_space<vmem>>, vector<128x128xf32>
    %cst = arith.constant dense<0.000000e+00> : vector<8x128xf32>
    %2 = tpu.matmul %0, %1, %cst {dimension_numbers = #tpu.dot_dimension_numbers<[1], [0], [0], [1], [0, 0, 1, 1], [], []>} : vector<8x128xf32>, vector<128x128xf32>, vector<8x128xf32> -> vector<8x128xf32>
    %c0_3 = arith.constant 0 : index
    %c0_4 = arith.constant 0 : index
    %3 = vector.load %arg4[%c0_3, %c0_4] : memref<1x128xf32, #tpu.memory_space<vmem>>, vector<1x128xf32>
    %4 = vector.broadcast %3 : vector<1x128xf32> to vector<8x128xf32>
    %5 = arith.addf %2, %4 : vector<8x128xf32>
    %cst_5 = arith.constant 0.000000e+00 : f32
    %6 = vector.broadcast %cst_5 : f32 to vector<8x128xf32>
    %7 = arith.maximumf %5, %6 : vector<8x128xf32>
    %c0_6 = arith.constant 0 : index
    %c0_7 = arith.constant 0 : index
    %8 = vector.load %arg5[%c0_6, %c0_7] : memref<8x128xf32, #tpu.memory_space<vmem>>, vector<8x128xf32>
    tpu.vector_store %arg5[%c0_6, %c0_7], %7 {strides = array<i32>} : memref<8x128xf32, #tpu.memory_space<vmem>>, vector<8x128xf32>,
    return
  }
  func.func @transform_0(%arg0: i32, %arg1: i32) -> (i32, i32) {
    %c0_i32 = arith.constant 0 : i32
    %c0_i32_0 = arith.constant 0 : i32
    return %arg0, %c0_i32 : i32, i32
  }
  func.func @transform_1(%arg0: i32, %arg1: i32) -> (i32, i32) {
    %c0_i32 = arith.constant 0 : i32
    %c0_i32_0 = arith.constant 0 : i32
    return %c0_i32, %arg1 : i32, i32
  }
  func.func @transform_2(%arg0: i32, %arg1: i32) -> (i32, i32) {
    %c0_i32 = arith.constant 0 : i32
    %c0_i32_0 = arith.constant 0 : i32
    return %c0_i32, %arg1 : i32, i32
  }
  func.func @transform_3(%arg0: i32, %arg1: i32) -> (i32, i32) {
    %c0_i32 = arith.constant 0 : i32
    return %arg0, %arg1 : i32, i32
  }
}

</mosaic_0001>

<llo_original>
// kernel: tpu_custom_call.1
$region0: #{tpu_custom_call.1}
  #allocation0 [shape = 'u32[]', space=smem, size = 0x4, offset = 0x4, fixed_abs, tag = 'smem constant byte address 0x4 - core index']
  #allocation1 [shape = 'u32[144,128]{1,0:T(1,128)}', space=vmem, size = 0x12000, scoped, tag = 'internal scratch']
  %s0 = inlined_call_operand.hbm [shape: f32[8,128], index: 0, kind: input, shape index: {}]
  %s1 = inlined_call_operand.hbm [shape: f32[128,128], index: 1, kind: input, shape index: {}]
  %s2 = inlined_call_operand.vmem [shape: f32[1,128], index: 2, kind: input, shape index: {}]
  %s3 = inlined_call_operand.hbm [shape: f32[8,128], index: 3, kind: output, shape index: {}]
  %s4 = sld [smem:[#allocation0]]
  $region30: #{tpu_custom_call.1} parent=0
    _
  %s6 = ssub.s32 1, %s4
  %s7 = scalar_select 0, %s6, %s4
  $region1: #{tpu_custom_call.1} parent=0
    #allocation2 [shape = 'u8[4096]{0}', space=vmem, size = 0x1000, scoped, tag = 'input window, operand 0, single buffered']
    #allocation3 [shape = 's32[1]{0}', space=sflag, size = 0x4, scoped, tag = 'scoped memory for tpu_custom_call.1']
    #allocation4 [shape = 's32[1]{0}', space=sflag, size = 0x4, scoped, tag = 'scoped memory for tpu_custom_call.1']
    #allocation5 [shape = 'u8[65536]{0}', space=vmem, size = 0x10000, scoped, tag = 'input window, operand 1, single buffered']
    #allocation6 [shape = 's32[1]{0}', space=sflag, size = 0x4, scoped, tag = 'scoped memory for tpu_custom_call.1']
    #allocation7 [shape = 'u8[4096]{0}', space=vmem, size = 0x1000, scoped, tag = 'output window, operand 0, single buffered']
    %8 = vsyncpa [#allocation3], 0
    %9 = vsyncpa [#allocation6], 0
    %10 = vsyncpa [#allocation4], 0
    // Predicated region
    $region2: #{tpu_custom_call.1} parent=1 // pred_check
      _
    $region3: #{tpu_custom_call.1} parent=1 // pred_check_branch
      %12 = sbr.rel (0) target = $region5
    $region4: #{tpu_custom_call.1} parent=1 // pred_region
      %s14 = ssub.s32 128, 128
      %15 = vsyncadd [#allocation3], %s14
      %s17 = sshll.u32 [#allocation2], 4
      %s18 = int_to_ptr.vmem [resolvable:$true] %s17
      %20 = dma.hbm_to_vmem [thread:$0]  %s0, 128, %s18, [#allocation3]
    $region5: #{tpu_custom_call.1} parent=1 // pred_fallthru
      _
    // Predicated region
    $region6: #{tpu_custom_call.1} parent=1 // pred_check
      _
    $region7: #{tpu_custom_call.1} parent=1 // pred_check_branch
      %22 = sbr.rel (0) target = $region9
    $region8: #{tpu_custom_call.1} parent=1 // pred_region
      %s24 = ssub.s32 2048, 2048
      %25 = vsyncadd [#allocation6], %s24
      %s26 = sshll.u32 [#allocation5], 4
      %s27 = int_to_ptr.vmem [resolvable:$true] %s26
      %32 = dma.hbm_to_vmem [thread:$0]  %s1, 2048, %s27, [#allocation6], 128, 128, 8
    $region9: #{tpu_custom_call.1} parent=1 // pred_fallthru
      _
    // Predicated region
    $region10: #{tpu_custom_call.1} parent=1 // pred_check
      _
    $region11: #{tpu_custom_call.1} parent=1 // pred_check_branch
      %34 = sbr.rel (0) target = $region13
    $region12: #{tpu_custom_call.1} parent=1 // pred_region
      _
    $region13: #{tpu_custom_call.1} parent=1 // pred_fallthru
      _
    // Predicated region
    $region14: #{tpu_custom_call.1} parent=1 // pred_check
      _
    $region15: #{tpu_custom_call.1} parent=1 // pred_check_branch
      %36 = sbr.rel (0) target = $region17
    $region16: #{tpu_custom_call.1} parent=1 // pred_region
      %37 = dma.done [#allocation3], 128
    $region17: #{tpu_custom_call.1} parent=1 // pred_fallthru
      _
    // Predicated region
    $region18: #{tpu_custom_call.1} parent=1 // pred_check
      _
    $region19: #{tpu_custom_call.1} parent=1 // pred_check_branch
      %39 = sbr.rel (0) target = $region21
    $region20: #{tpu_custom_call.1} parent=1 // pred_region
      %40 = dma.done [#allocation6], 2048
    $region21: #{tpu_custom_call.1} parent=1 // pred_fallthru
      _
    %v41 = vld [vmem:[#allocation2] sm:$0xff]
    %v42 = vld [vmem:[#allocation5] sm:$0xff]
    %v43 = vld [vmem:[#allocation5 + $0x8] sm:$0xff]
    %v44 = vld [vmem:[#allocation5 + $0x10] sm:$0xff]
    %v45 = vld [vmem:[#allocation5 + $0x18] sm:$0xff]
    %v46 = vld [vmem:[#allocation5 + $0x20] sm:$0xff]
    %v47 = vld [vmem:[#allocation5 + $0x28] sm:$0xff]
    %v48 = vld [vmem:[#allocation5 + $0x30] sm:$0xff]
    %v49 = vld [vmem:[#allocation5 + $0x38] sm:$0xff]
    %v50 = vld [vmem:[#allocation5 + $0x40] sm:$0xff]
    %v51 = vld [vmem:[#allocation5 + $0x48] sm:$0xff]
    %v52 = vld [vmem:[#allocation5 + $0x50] sm:$0xff]
    %v53 = vld [vmem:[#allocation5 + $0x58] sm:$0xff]
    %v54 = vld [vmem:[#allocation5 + $0x60] sm:$0xff]
    %v55 = vld [vmem:[#allocation5 + $0x68] sm:$0xff]
    %v56 = vld [vmem:[#allocation5 + $0x70] sm:$0xff]
    %v57 = vld [vmem:[#allocation5 + $0x78] sm:$0xff]
    %v58 = vld [vmem:[%s2] sm:$0x1]
    %v60 = vlaneseq
    %v61 = vshrl.u32 %v60, 7
    %v62 = vsub.s32 0, %v61
    %v63 = vrot.slane %v58, %v62
    %65 = vmatprep.subr.mxu0 0.0
    %66 = vmatpush1.msra.mxu0 %v57
    %67 = vmatprep.subr.mxu0 0.0
    %68 = vmatpush1.msra.mxu0 %v56
    %69 = vmatprep.subr.mxu0 0.0
    %70 = vmatpush1.msra.mxu0 %v55
    %71 = vmatprep.subr.mxu0 0.0
    %72 = vmatpush1.msra.mxu0 %v54
    %73 = vmatprep.subr.mxu0 0.0
    %74 = vmatpush1.msra.mxu0 %v53
    %75 = vmatprep.subr.mxu0 0.0
    %76 = vmatpush1.msra.mxu0 %v52
    %77 = vmatprep.subr.mxu0 0.0
    %78 = vmatpush1.msra.mxu0 %v51
    %79 = vmatprep.subr.mxu0 0.0
    %80 = vmatpush1.msra.mxu0 %v50
    %81 = vmatprep.subr.mxu0 0.0
    %82 = vmatpush1.msra.mxu0 %v49
    %83 = vmatprep.subr.mxu0 0.0
    %84 = vmatpush1.msra.mxu0 %v48
    %85 = vmatprep.subr.mxu0 0.0
    %86 = vmatpush1.msra.mxu0 %v47
    %87 = vmatprep.subr.mxu0 0.0
    %88 = vmatpush1.msra.mxu0 %v46
    %89 = vmatprep.subr.mxu0 0.0
    %90 = vmatpush1.msra.mxu0 %v45
    %91 = vmatprep.subr.mxu0 0.0
    %92 = vmatpush1.msra.mxu0 %v44
    %93 = vmatprep.subr.mxu0 0.0
    %94 = vmatpush1.msra.mxu0 %v43
    %95 = vmatprep.subr.mxu0 0.0
    %96 = vmatpush1.msra.mxu0 %v42
    %97 = vmatprep.subr.mxu0 0.0
    %98 = vmatpush2.msra.mxu0 0.0
    %99 = vmatprep.subr.mxu0 0.0
    %100 = vmatpush2.msra.mxu0 0.0
    %101 = vmatprep.subr.mxu0 0.0
    %102 = vmatpush2.msra.mxu0 0.0
    %103 = vmatprep.subr.mxu0 0.0
    %104 = vmatpush2.msra.mxu0 0.0
    %105 = vmatprep.subr.mxu0 0.0
    %106 = vmatpush2.msra.mxu0 0.0
    %107 = vmatprep.subr.mxu0 0.0
    %108 = vmatpush2.msra.mxu0 0.0
    %109 = vmatprep.subr.mxu0 0.0
    %110 = vmatpush2.msra.mxu0 0.0
    %111 = vmatprep.subr.mxu0 0.0
    %112 = vmatpush2.msra.mxu0 0.0
    %113 = vmatprep.subr.mxu0 0.0
    %114 = vmatpush2.msra.mxu0 0.0
    %115 = vmatprep.subr.mxu0 0.0
    %116 = vmatpush2.msra.mxu0 0.0
    %117 = vmatprep.subr.mxu0 0.0
    %118 = vmatpush2.msra.mxu0 0.0
    %119 = vmatprep.subr.mxu0 0.0
    %120 = vmatpush2.msra.mxu0 0.0
    %121 = vmatprep.subr.mxu0 0.0
    %122 = vmatpush2.msra.mxu0 0.0
    %123 = vmatprep.subr.mxu0 0.0
    %124 = vmatpush2.msra.mxu0 0.0
    %125 = vmatprep.subr.mxu0 0.0
    %126 = vmatpush2.msra.mxu0 0.0
    %127 = vmatprep.subr.mxu0 0.0
    %128 = vmatpush2.msra.mxu0 0.0
    %129 = vmatprep.mubr.f32.mxu0 0.0
    %130 = vmatmul.mubr.f32.gmra.mxu0 %v41
    %v131 = vpop.f32.mrf.mxu0
    %v132 = vadd.f32 %v63, %v131
    %v133 = vpop.f32.mrf.mxu0
    %134 = vdwg.mxu0
    %v135 = vmax.f32 %v132, 0.0
    %136 = vst [vmem:[#allocation7] sm:$0xff] %v135
    // Predicated region
    $region22: #{tpu_custom_call.1} parent=1 // pred_check
      _
    $region23: #{tpu_custom_call.1} parent=1 // pred_check_branch
      %138 = sbr.rel (0) target = $region25
    $region24: #{tpu_custom_call.1} parent=1 // pred_region
      %s140 = ssub.s32 128, 128
      %141 = vsyncadd [#allocation4], %s140
      %s143 = sshll.u32 [#allocation7], 4
      %s144 = int_to_ptr.vmem [resolvable:$true] %s143
      %146 = dma.vmem_to_hbm [thread:$0]  %s144, 128, %s3, [#allocation4]
    $region25: #{tpu_custom_call.1} parent=1 // pred_fallthru
      _
    // Predicated region
    $region26: #{tpu_custom_call.1} parent=1 // pred_check
      _
    $region27: #{tpu_custom_call.1} parent=1 // pred_check_branch
      %148 = sbr.rel (0) target = $region29
    $region28: #{tpu_custom_call.1} parent=1 // pred_region
      %149 = dma.done [#allocation4], 128
    $region29: #{tpu_custom_call.1} parent=1 // pred_fallthru
      _
    %150 = vsyncpa [#allocation3], 1
    %151 = vsyncpa [#allocation6], 1
    %152 = vsyncpa [#allocation4], 1

</llo_original>
